<compile_context>
chip_gen: v7x
topology: tpu7x:2x2x1
jax: 0.10.0
libtpu: 0.0.40
codegen_flags: <defaults>
</compile_context>

<pallas_src>
import functools
import math

import jax
import jax.numpy as jnp
from jax.experimental import pallas as pl
from jax.experimental.pallas import tpu as pltpu


def _round_up(a, b):
    return -(-a // b) * b


def _num_tensorcores():
    # v7x has 2 TensorCores per chip; v5e/v6e have 1.
    try:
        kind = jax.devices()[0].device_kind.lower()
    except Exception:
        return 1
    return 2 if "v7" in kind else 1


def _choose_block(seq_len, sublane, num_cores, cap=4096):
    """Sequence tile: multiple of the dtype's sublane tile, <= cap rows.

    One block per TensorCore when the sequence fits under the cap; long
    sequences fall back to cap-row tiles (grid then has multiple 'parallel'
    steps which v7x's two cores can shard).  Single-TC chips get one block
    covering the whole (padded) sequence when it fits -> minimal step overhead.
    """
    per_core = -(-max(seq_len, 1) // num_cores)
    return _round_up(min(per_core, cap), sublane)


def _rope_split_kernel(inv_full_ref, cos_ref, sin_ref, *, block_s):
    # Positions covered by this grid step.
    start = pl.program_id(0) * block_s
    row = jax.lax.broadcasted_iota(jnp.int32, cos_ref.shape, 0) + start
    # freqs[i, j] = t[i] * inv_freq[j % half_dim]  -- VPU broadcast multiply.
    freqs = row.astype(jnp.float32) * inv_full_ref[...]       # (block_s, dim) f32
    # Direct, lane-dense stores; cast once at the store.
    cos_ref[...] = jnp.cos(freqs).astype(cos_ref.dtype)
    sin_ref[...] = jnp.sin(freqs).astype(sin_ref.dtype)


def _rope_fused_kernel(inv2_ref, phase_ref, out_ref, *, block_s):
    # Fused row layout: [cos(emb) | sin(emb)], emb = [freqs, freqs].
    # Single full-lane-width transcendental via cos(x) = sin(x + pi/2).
    start = pl.program_id(0) * block_s
    row = jax.lax.broadcasted_iota(jnp.int32, out_ref.shape, 0) + start
    angle = row.astype(jnp.float32) * inv2_ref[...] + phase_ref[...]
    out_ref[...] = jnp.sin(angle).astype(out_ref.dtype)


def llama_rotary_embedding(x, seq_len, *, dim, base=10000.0):
    """Returns (cos, sin), each of shape (1, 1, seq_len, dim), dtype x.dtype."""
    assert dim % 2 == 0, "dim must be even"
    half_dim = dim // 2
    out_dtype = x.dtype
    itemsize = jnp.dtype(out_dtype).itemsize
    sublane = max(8, 32 // itemsize)        # 8 for f32, 16 for bf16, 32 for int8

    # Deterministic "parameter" setup (same as the torch module's __init__).
    inv_freq = 1.0 / (base ** (jnp.arange(0, dim, 2, dtype=jnp.float32) / dim))

    block_s = _choose_block(seq_len, sublane, _num_tensorcores())
    seq_pad = _round_up(seq_len, block_s)
    grid = (seq_pad // block_s,)

    if dim % 128 == 0:
        # Lane-dense per-output stores; no fused slab, no wrapper lane-slices.
        inv_full = jnp.tile(inv_freq, 2).reshape(1, dim)      # inv_freq[j % half]
        out_block_bytes = 2 * block_s * dim * itemsize
        vmem_limit = int(min(32 << 20, max(16 << 20, 6 * out_block_bytes)))
        cost = pl.CostEstimate(
            flops=2 * seq_pad * dim,
            transcendentals=2 * seq_pad * dim,
            bytes_accessed=2 * seq_pad * dim * itemsize + dim * 4,
        )
        cos_pad, sin_pad = pl.pallas_call(
            functools.partial(_rope_split_kernel, block_s=block_s),
            out_shape=(
                jax.ShapeDtypeStruct((seq_pad, dim), out_dtype),
                jax.ShapeDtypeStruct((seq_pad, dim), out_dtype),
            ),
            grid_spec=pltpu.PrefetchScalarGridSpec(
                num_scalar_prefetch=0,
                grid=grid,
                in_specs=[pl.BlockSpec((1, dim), lambda i: (0, 0))],
                out_specs=[
                    pl.BlockSpec((block_s, dim), lambda i: (i, 0)),
                    pl.BlockSpec((block_s, dim), lambda i: (i, 0)),
                ],
            ),
            compiler_params=pltpu.CompilerParams(
                dimension_semantics=("parallel",),
                vmem_limit_bytes=vmem_limit,
            ),
            cost_estimate=cost,
        )(inv_full)
        cos = cos_pad[:seq_len][None, None, :, :]
        sin = sin_pad[:seq_len][None, None, :, :]
        return cos, sin

    # dim < 128 (or not a multiple of 128): a fused (seq_pad, 2*dim) slab keeps
    # the store lane-dense (dim=64 -> 128 lanes); wrapper slices cos / sin.
    inv2 = jnp.tile(inv_freq, 4).reshape(1, 2 * dim)          # inv_freq[j % half]
    phase = jnp.concatenate(
        [jnp.full((dim,), 0.5 * math.pi, dtype=jnp.float32),
         jnp.zeros((dim,), dtype=jnp.float32)]).reshape(1, 2 * dim)
    out_block_bytes = block_s * 2 * dim * itemsize
    vmem_limit = int(min(32 << 20, max(16 << 20, 6 * out_block_bytes)))
    cost = pl.CostEstimate(
        flops=3 * seq_pad * dim,
        transcendentals=2 * seq_pad * dim,
        bytes_accessed=2 * seq_pad * dim * itemsize + 4 * dim * 4,
    )
    fused = pl.pallas_call(
        functools.partial(_rope_fused_kernel, block_s=block_s),
        out_shape=jax.ShapeDtypeStruct((seq_pad, 2 * dim), out_dtype),
        grid_spec=pltpu.PrefetchScalarGridSpec(
            num_scalar_prefetch=0,
            grid=grid,
            in_specs=[
                pl.BlockSpec((1, 2 * dim), lambda i: (0, 0)),
                pl.BlockSpec((1, 2 * dim), lambda i: (0, 0)),
            ],
            out_specs=pl.BlockSpec((block_s, 2 * dim), lambda i: (i, 0)),
        ),
        compiler_params=pltpu.CompilerParams(
            dimension_semantics=("parallel",),
            vmem_limit_bytes=vmem_limit,
        ),
        cost_estimate=cost,
    )(inv2, phase)
    cos = fused[:seq_len, :dim][None, None, :, :]
    sin = fused[:seq_len, dim:][None, None, :, :]
    return cos, sin


def _reference(x, seq_len, dim, base=10000.0):
    inv_freq = 1.0 / (base ** (jnp.arange(0, dim, 2, dtype=jnp.float32) / dim))
    t = jnp.arange(seq_len, dtype=jnp.float32)
    freqs = jnp.einsum("i,j->ij", t, inv_freq)
    emb = jnp.concatenate([freqs, freqs], axis=-1)
    cos = jnp.cos(emb)[None, None, :, :].astype(x.dtype)
    sin = jnp.sin(emb)[None, None, :, :].astype(x.dtype)
    return cos, sin


def _check(x, seq_len, dim):
    cos, sin = llama_rotary_embedding(x, seq_len, dim=dim)
    cos = jax.block_until_ready(cos)
    sin = jax.block_until_ready(sin)
    cos_ref, sin_ref = _reference(x, seq_len, dim)
    assert cos.shape == (1, 1, seq_len, dim) and sin.shape == (1, 1, seq_len, dim)
    assert cos.dtype == x.dtype and sin.dtype == x.dtype
    # f32: tight tolerance; bf16: one-ulp slack (phase-trick rounding can flip
    # the last bf16 bit in rare cases).
    tol = 1e-5 if x.dtype == jnp.float32 else 1e-2
    assert jnp.allclose(cos.astype(jnp.float32), cos_ref.astype(jnp.float32),
                        atol=tol, rtol=tol)
    assert jnp.allclose(sin.astype(jnp.float32), sin_ref.astype(jnp.float32),
                        atol=tol, rtol=tol)


if __name__ == "__main__":
    key = jax.random.PRNGKey(0)

    # Case 1: small shapes consistent with the module's forward
    # (x only supplies dtype).  dim=32 -> fused 64-lane slab path.
    batch, n_heads, seq_len, dim = 2, 4, 8, 32
    x = jax.random.normal(key, (batch, n_heads, seq_len, dim), dtype=jnp.float32)
    _check(x, seq_len, dim)

    # Case 2: non-sublane-multiple seq_len, bf16 dtype, dim=64 -> fused
    # 128-lane slab + single full-width sin (phase trick).
    seq_len2, dim2 = 200, 64
    x2 = jax.random.normal(key, (1, 2, seq_len2, dim2), dtype=jnp.bfloat16)
    _check(x2, seq_len2, dim2)

    # Case 3: dim multiple of 128 -> two separate lane-dense outputs path.
    seq_len3, dim3 = 256, 128
    x3 = jax.random.normal(key, (1, 2, seq_len3, dim3), dtype=jnp.float32)
    _check(x3, seq_len3, dim3)

    print("KERNEL_OK")
</pallas_src>

<mosaic_0001>
module attributes {stable_mosaic.version = 11 : i64} {
  func.func @_rope_fused_kernel(%arg0: i32, %arg1: memref<1x64xf32, #tpu.memory_space<vmem>>, %arg2: memref<1x64xf32, #tpu.memory_space<vmem>>, %arg3: memref<8x64xf32, #tpu.memory_space<vmem>>) attributes {dimension_semantics = [#tpu.dimension_semantics<parallel>], iteration_bounds = array<i64: 1>, scalar_prefetch = 0 : i64, scratch_operands = 0 : i64, tpu.core_type = #tpu.core_type<tc>, window_params = [{pipeline_mode = #tpu.pipeline_mode<synchronous>, transform_indices = @transform_0, window_bounds = array<i64: 1, 64>}, {pipeline_mode = #tpu.pipeline_mode<synchronous>, transform_indices = @transform_1, window_bounds = array<i64: 1, 64>}, {transform_indices = @transform_2, window_bounds = array<i64: 8, 64>}]} {
    %c8_i32 = arith.constant 8 : i32
    %0 = arith.muli %arg0, %c8_i32 : i32
    %1 = tpu.iota {dimensions = array<i32: 0>} : vector<8x64xi32>
    %2 = vector.broadcast %0 : i32 to vector<8x64xi32>
    %3 = arith.addi %1, %2 : vector<8x64xi32>
    %4 = arith.sitofp %3 : vector<8x64xi32> to vector<8x64xf32>
    %c0 = arith.constant 0 : index
    %c0_0 = arith.constant 0 : index
    %5 = vector.load %arg1[%c0, %c0_0] : memref<1x64xf32, #tpu.memory_space<vmem>>, vector<1x64xf32>
    %6 = vector.broadcast %5 : vector<1x64xf32> to vector<8x64xf32>
    %7 = arith.mulf %4, %6 : vector<8x64xf32>
    %c0_1 = arith.constant 0 : index
    %c0_2 = arith.constant 0 : index
    %8 = vector.load %arg2[%c0_1, %c0_2] : memref<1x64xf32, #tpu.memory_space<vmem>>, vector<1x64xf32>
    %9 = vector.broadcast %8 : vector<1x64xf32> to vector<8x64xf32>
    %10 = arith.addf %7, %9 : vector<8x64xf32>
    %11 = math.sin %10 : vector<8x64xf32>
    %c0_3 = arith.constant 0 : index
    %c0_4 = arith.constant 0 : index
    %12 = vector.load %arg3[%c0_3, %c0_4] : memref<8x64xf32, #tpu.memory_space<vmem>>, vector<8x64xf32>
    tpu.vector_store %arg3[%c0_3, %c0_4], %11 {strides = array<i32>} : memref<8x64xf32, #tpu.memory_space<vmem>>, vector<8x64xf32>,
    return
  }
  func.func @transform_0(%arg0: i32) -> (i32, i32) {
    %c0_i32 = arith.constant 0 : i32
    %c0_i32_0 = arith.constant 0 : i32
    %c0_i32_1 = arith.constant 0 : i32
    return %c0_i32, %c0_i32_0 : i32, i32
  }
  func.func @transform_1(%arg0: i32) -> (i32, i32) {
    %c0_i32 = arith.constant 0 : i32
    %c0_i32_0 = arith.constant 0 : i32
    %c0_i32_1 = arith.constant 0 : i32
    return %c0_i32, %c0_i32_0 : i32, i32
  }
  func.func @transform_2(%arg0: i32) -> (i32, i32) {
    %c0_i32 = arith.constant 0 : i32
    %c0_i32_0 = arith.constant 0 : i32
    return %arg0, %c0_i32 : i32, i32
  }
}

</mosaic_0001>

<llo_original>
// kernel: tpu_custom_call.1
$region0: #{tpu_custom_call.1}
  #allocation0 [shape = 'u32[]', space=smem, size = 0x4, offset = 0x4, fixed_abs, tag = 'smem constant byte address 0x4 - core index']
  #allocation1 [shape = 'u32[144,128]{1,0:T(1,128)}', space=vmem, size = 0x12000, scoped, tag = 'internal scratch']
  %s0 = inlined_call_operand.hbm [shape: f32[1,64], index: 0, kind: input, shape index: {}]
  %s1 = inlined_call_operand.vmem [shape: f32[1,64], index: 1, kind: input, shape index: {}]
  %s2 = inlined_call_operand.hbm [shape: f32[8,64], index: 2, kind: output, shape index: {}]
  %s3 = sld [smem:[#allocation0]]
  $region22: #{tpu_custom_call.1} parent=0
    _
  %s5 = ssub.s32 1, %s3
  %s6 = scalar_select 0, %s5, %s3
  $region1: #{tpu_custom_call.1} parent=0
    #allocation2 [shape = 'u8[512]{0}', space=vmem, size = 0x400, scoped, tag = 'input window, operand 0, single buffered']
    #allocation3 [shape = 's32[1]{0}', space=sflag, size = 0x4, scoped, tag = 'scoped memory for tpu_custom_call.1']
    #allocation4 [shape = 's32[1]{0}', space=sflag, size = 0x4, scoped, tag = 'scoped memory for tpu_custom_call.1']
    #allocation5 [shape = 'u8[4096]{0}', space=vmem, size = 0x1000, scoped, tag = 'output window, operand 0, single buffered']
    %7 = vsyncpa [#allocation3], 0
    %8 = vsyncpa [#allocation4], 0
    // Predicated region
    $region2: #{tpu_custom_call.1} parent=1 // pred_check
      _
    $region3: #{tpu_custom_call.1} parent=1 // pred_check_branch
      %10 = sbr.rel (0) target = $region5
    $region4: #{tpu_custom_call.1} parent=1 // pred_region
      %s12 = ssub.s32 16, 16
      %13 = vsyncadd [#allocation3], %s12
      %s15 = sshll.u32 [#allocation2], 4
      %s16 = int_to_ptr.vmem [resolvable:$true] %s15
      %18 = dma.hbm_to_vmem [thread:$0]  %s0, 16, %s16, [#allocation3]
    $region5: #{tpu_custom_call.1} parent=1 // pred_fallthru
      _
    // Predicated region
    $region6: #{tpu_custom_call.1} parent=1 // pred_check
      _
    $region7: #{tpu_custom_call.1} parent=1 // pred_check_branch
      %20 = sbr.rel (0) target = $region9
    $region8: #{tpu_custom_call.1} parent=1 // pred_region
      _
    $region9: #{tpu_custom_call.1} parent=1 // pred_fallthru
      _
    // Predicated region
    $region10: #{tpu_custom_call.1} parent=1 // pred_check
      _
    $region11: #{tpu_custom_call.1} parent=1 // pred_check_branch
      %22 = sbr.rel (0) target = $region13
    $region12: #{tpu_custom_call.1} parent=1 // pred_region
      %23 = dma.done [#allocation3], 16
    $region13: #{tpu_custom_call.1} parent=1 // pred_fallthru
      _
    %s24 = smul.u32 0, 8
    %v25 = vlaneseq
    %v26 = vshrl.u32 %v25, 7
    %v27 = vstv %s24
    %v28 = vadd.s32 %v26, %v27
    %v29 = vcvt.s32.f32 %v28
    %v30 = vld [vmem:[#allocation2] sm:$0x1]
    %v32 = vlaneseq
    %v33 = vshrl.u32 %v32, 7
    %v34 = vsub.s32 0, %v33
    %v35 = vrot.slane %v30, %v34
    %v37 = vmul.f32 %v29, %v35
    %v38 = vld [vmem:[%s1] sm:$0x1]
    %v40 = vlaneseq
    %v41 = vshrl.u32 %v40, 7
    %v42 = vsub.s32 0, %v41
    %v43 = vrot.slane %v38, %v42
    %v45 = vadd.f32 %v37, %v43
    %v46 = vand.u32 2147483647, %v45
    %vm47 = vcmp.le.f32.partialorder %v46, 0.7853982
    %vm48 = vcmp.lt.s32.totalorder %v45, 0
    %v49 = vand.u32 %v45, 2139095040
    %v50 = vshrl.u32 %v49, 23
    %v51 = vsub.s32 %v50, 127
    %v52 = vand.u32 2147483647, %v45
    %v53 = vand.u32 %v52, 8388607
    %v54 = vor.u32 %v53, 8388608
    %v55 = vsub.s32 0, %v54
    %v56 = vadd.s32 %v51, 1
    %vm57 = vcmp.gt.s32.totalorder %v56, 0
    %v58 = vsel %vm57, %v56, 0
    %v59 = vshrl.u32 %v58, 5
    %v60 = vand.u32 %v58, 31
    %v61 = vsub.s32 32, %v60
    %v62 = vshrl.u32 683565275, %v61
    %v63 = vshll.u32 683565275, %v60
    %v64 = vshrl.u32 2475754826, %v61
    %v65 = vor.u32 %v63, %v64
    %v66 = vshll.u32 2475754826, %v60
    %v67 = vshrl.u32 2131351028, %v61
    %v68 = vor.u32 %v66, %v67
    %v69 = vshll.u32 2131351028, %v60
    %v70 = vshrl.u32 2102212464, %v61
    %v71 = vor.u32 %v69, %v70
    %v72 = vshll.u32 2102212464, %v60
    %v73 = vshrl.u32 920167782, %v61
    %v74 = vor.u32 %v72, %v73
    %v75 = vshll.u32 920167782, %v60
    %v76 = vshrl.u32 1326507024, %v61
    %v77 = vor.u32 %v75, %v76
    %vm78 = vcmp.lt.s32.totalorder %v59, 1
    %vm79 = vcmp.lt.s32.totalorder %v59, 2
    %vm80 = vcmp.lt.s32.totalorder %v59, 3
    %vm81 = vcmp.lt.s32.totalorder %v59, 4
    %v82 = vsel %vm78, %v62, %v65
    %v83 = vsel %vm81, %v71, 2102212464
    %v84 = vsel %vm80, %v68, %v83
    %v85 = vsel %vm79, %v82, %v84
    %v86 = vsel %vm78, %v65, %v68
    %v87 = vsel %vm81, %v74, 920167782
    %v88 = vsel %vm80, %v71, %v87
    %v89 = vsel %vm79, %v86, %v88
    %v90 = vsel %vm78, %v68, %v71
    %v91 = vsel %vm81, %v77, 1326507024
    %v92 = vsel %vm80, %v74, %v91
    %v93 = vsel %vm79, %v90, %v92
    %v94 = vshll.u32 %v54, 8
    %v95 = vmul.u32.u64.compose %v94, %v93
    %v96 = vextract.low.u32 %v95
    %v97 = vextract.high.u32 %v95
    %v98 = vmul.u32.u64.compose %v94, %v89
    %v99 = vextract.low.u32 %v98
    %v100 = vextract.high.u32 %v98
    %v101 = vmul.u32 %v94, %v85
    %v102 = vadd.s32 %v97, %v99
    %vm103 = vc.u32 %v97, %v99
    %v104 = vadd.s32 %v100, 1
    %v105 = vsel %vm103, %v104, %v100
    %v106 = vadd.s32 %v101, %v105
    %v107 = vadd.s32 %v106, 536870912
    %v108 = vshrl.u32 %v107, 30
    %v109 = vshll.u32 %v108, 30
    %v110 = vsub.s32 %v106, %v109
    %vm111 = vcmp.lt.s32.totalorder %v110, 0
    %v112 = vsub.s32 0, %v110
    %v113 = vsel %vm111, %v112, %v110
    %v114 = vclz %v113
    %v115 = vsub.s32 %v114, 2
    %vm116 = vcmp.gt.s32.totalorder 0, %v115
    %v117 = vsel %vm116, 0, %v115
    %v118 = vsub.s32 32, %v117
    %v119 = vshll.u32 %v110, %v117
    %v120 = vshrl.u32 %v102, %v118
    %v121 = vor.u32 %v119, %v120
    %v122 = vsub.s32 4294967266, %v117
    %v123 = vadd.s32 %v122, 127
    %v124 = vshll.u32 %v123, 23
    %v125 = vor.u32 4788187, %v124
    %v126 = vand.u32 2147483647, %v125
    %v128 = vcvt.s32.f32 %v121
    %v129 = vmul.f32 %v128, %v126
    %v130 = vxor.u32 %v129, 2147483648
    %v131 = vsel %vm48, %v130, %v129
    %v132 = vsub.s32 4, %v108
    %v133 = vsel %vm48, %v132, %v108
    %v134 = vsel %vm47, %v45, %v131
    %v135 = vsel %vm47, 0, %v133
    %v136 = vcosq.f32.pop %v134
    %v137 = vsinq.f32.pop %v134
    %vm138 = vweird.f32 %v45
    %v139 = vadd.s32 %v135, 3
    %v140 = vand.u32 %v139, 3
    %vm141 = vcmp.lt.s32.totalorder %v140, 2
    %vm142 = vcmp.eq.s32.totalorder %v140, 0
    %v143 = vxor.u32 %v137, 2147483648
    %v144 = vsel %vm142, %v136, %v143
    %vm145 = vcmp.eq.s32.totalorder %v140, 2
    %v146 = vxor.u32 %v136, 2147483648
    %v147 = vsel %vm145, %v146, %v137
    %v148 = vsel %vm141, %v144, %v147
    %v149 = vsel %vm138, nan, %v148
    %vm150 = vcmask 523264
    %151 = vst.msk [vmem:[#allocation5] sm:$0xff] %vm150, %v149
    // Predicated region
    $region14: #{tpu_custom_call.1} parent=1 // pred_check
      _
    $region15: #{tpu_custom_call.1} parent=1 // pred_check_branch
      %153 = sbr.rel (0) target = $region17
    $region16: #{tpu_custom_call.1} parent=1 // pred_region
      %s155 = ssub.s32 128, 128
      %156 = vsyncadd [#allocation4], %s155
      %s158 = sshll.u32 [#allocation5], 4
      %s159 = int_to_ptr.vmem [resolvable:$true] %s158
      %161 = dma.vmem_to_hbm [thread:$0]  %s159, 128, %s2, [#allocation4]
    $region17: #{tpu_custom_call.1} parent=1 // pred_fallthru
      _
    // Predicated region
    $region18: #{tpu_custom_call.1} parent=1 // pred_check
      _
    $region19: #{tpu_custom_call.1} parent=1 // pred_check_branch
      %163 = sbr.rel (0) target = $region21
    $region20: #{tpu_custom_call.1} parent=1 // pred_region
      %164 = dma.done [#allocation4], 128
    $region21: #{tpu_custom_call.1} parent=1 // pred_fallthru
      _
    %165 = vsyncpa [#allocation3], 1
    %166 = vsyncpa [#allocation4], 1

</llo_original>
